<compile_context>
chip_gen: v5e
topology: v5e:2x2
jax: 0.10.0
libtpu: 0.0.40
codegen_flags: <defaults>
</compile_context>

<pallas_src>
import functools

import jax
import jax.numpy as jnp
from jax.experimental import pallas as pl
from jax.experimental.pallas import tpu as pltpu

BN_EPS = 1e-4


def _round_up(x, m):
    return (x + m - 1) // m * m


def _conv_stats_kernel(patches_ref, w_ref, gamma_ref, beta_ref, y_ref, stats_ref,
                       *, inv_m, is_bn):
    """Pass 1: per-M-tile matmul + global per-channel sum / sumsq accumulation.

    stats_ref (constant output block, VMEM-resident across the grid) holds
    [sum; sumsq] while accumulating and is overwritten with [scale; offset]
    on the last grid step.
    """
    i = pl.program_id(0)
    nsteps = pl.num_programs(0)

    # MXU: bf16 inputs, f32 accumulate.
    y = jnp.dot(patches_ref[...], w_ref[...], preferred_element_type=jnp.float32)
    y_ref[...] = y

    if is_bn:
        @pl.when(i == 0)
        def _init():
            stats_ref[...] = jnp.zeros_like(stats_ref)

        # Zero-padded rows of `patches` produce exactly-zero y rows, so they do not
        # perturb sum / sumsq; only the divisor (true M, baked into inv_m) matters.
        stats_ref[0:1, :] += jnp.sum(y, axis=0, keepdims=True)
        stats_ref[1:2, :] += jnp.sum(y * y, axis=0, keepdims=True)

        @pl.when(i == nsteps - 1)
        def _finalize():
            mean = stats_ref[0:1, :] * inv_m
            var = jnp.maximum(stats_ref[1:2, :] * inv_m - mean * mean, 0.0)
            scale = gamma_ref[...] * jax.lax.rsqrt(var + BN_EPS)
            offset = beta_ref[...] - mean * scale
            stats_ref[0:1, :] = scale
            stats_ref[1:2, :] = offset
    else:
        @pl.when(i == 0)
        def _identity():
            stats_ref[0:1, :] = jnp.ones_like(stats_ref[0:1, :])
            stats_ref[1:2, :] = jnp.zeros_like(stats_ref[1:2, :])


def _bn_relu_kernel(y_ref, stats_ref, out_ref, *, is_relu):
    """Pass 2: single per-channel FMA (folded BN) + ReLU, f32 epilogue math."""
    y = y_ref[...] * stats_ref[0:1, :] + stats_ref[1:2, :]
    if is_relu:
        y = jnp.maximum(y, 0.0)
    out_ref[...] = y.astype(out_ref.dtype)


def conv_bn_relu_2d(x_nchw, weight, gamma=None, beta=None, *, stride=1, padding=1,
                    dilation=1, is_bn=True, is_relu=True, tile_m=256):
    """Forward pass of ConvBnRelu2d. x_nchw: [N,Cin,H,W], weight: [Cout,Cin,KH,KW]."""
    N, Cin, H, W = x_nchw.shape
    Cout, Cin_w, KH, KW = weight.shape
    assert Cin == Cin_w  # TODO(synk): groups != 1 not implemented (module default is groups=1)

    H_out = (H + 2 * padding - dilation * (KH - 1) - 1) // stride + 1
    W_out = (W + 2 * padding - dilation * (KW - 1) - 1) // stride + 1

    # --- wrapper glue: NCHW -> NHWC, zero-pad, im2col ---
    # TODO(synk): replace this im2col with in-kernel accumulation of KH*KW shifted
    # matmuls over NHWC row tiles (halo rows via element-offset / manual DMA) to cut
    # activation HBM traffic ~KH*KW x; kept wrapper-side here for robustness.
    x = jnp.transpose(x_nchw, (0, 2, 3, 1))                       # NHWC
    x = jnp.pad(x, ((0, 0), (padding, padding), (padding, padding), (0, 0)))

    slabs = []
    for kh in range(KH):
        for kw in range(KW):
            h0 = kh * dilation
            w0 = kw * dilation
            slabs.append(x[:, h0:h0 + stride * H_out:stride,
                            w0:w0 + stride * W_out:stride, :])
    patches = jnp.stack(slabs, axis=3)                            # [N,Ho,Wo,KH*KW,Cin]
    M = N * H_out * W_out
    K = KH * KW * Cin
    patches = patches.reshape(M, K)

    # --- lane / sublane padding: K, Cout -> multiples of 128; M -> multiple of tile ---
    Kp = _round_up(K, 128)
    Coutp = _round_up(Cout, 128)
    tile_m = max(8, _round_up(min(tile_m, _round_up(M, 8)), 8))
    Mp = _round_up(M, tile_m)
    n_tiles = Mp // tile_m

    # bf16 MXU inputs (f32 accumulation in-kernel), f32 BN params.
    patches_p = jnp.zeros((Mp, Kp), jnp.bfloat16).at[:M, :K].set(
        patches.astype(jnp.bfloat16))
    w_mat = jnp.transpose(weight, (2, 3, 1, 0)).reshape(K, Cout)  # matches patch order
    w_p = jnp.zeros((Kp, Coutp), jnp.bfloat16).at[:K, :Cout].set(
        w_mat.astype(jnp.bfloat16))

    if gamma is None:
        gamma = jnp.ones((Cout,), jnp.float32)
    if beta is None:
        beta = jnp.zeros((Cout,), jnp.float32)
    gamma_p = jnp.zeros((1, Coutp), jnp.float32).at[0, :Cout].set(
        gamma.astype(jnp.float32))
    beta_p = jnp.zeros((1, Coutp), jnp.float32).at[0, :Cout].set(
        beta.astype(jnp.float32))

    # --- pass 1: tiled matmul + global BN stats -> folded (scale, offset) ---
    pass1 = pl.pallas_call(
        functools.partial(_conv_stats_kernel, inv_m=1.0 / float(M), is_bn=is_bn),
        out_shape=(jax.ShapeDtypeStruct((Mp, Coutp), jnp.float32),
                   jax.ShapeDtypeStruct((2, Coutp), jnp.float32)),
        grid=(n_tiles,),
        in_specs=[
            pl.BlockSpec((tile_m, Kp), lambda i: (i, 0)),
            pl.BlockSpec((Kp, Coutp), lambda i: (0, 0)),     # weights stay resident
            pl.BlockSpec((1, Coutp), lambda i: (0, 0)),
            pl.BlockSpec((1, Coutp), lambda i: (0, 0)),
        ],
        out_specs=(
            pl.BlockSpec((tile_m, Coutp), lambda i: (i, 0)),
            pl.BlockSpec((2, Coutp), lambda i: (0, 0)),      # resident accumulator
        ),
        compiler_params=pltpu.CompilerParams(
            dimension_semantics=("arbitrary",),              # cross-tile accumulator
            vmem_limit_bytes=64 * 1024 * 1024),
        cost_estimate=pl.CostEstimate(
            flops=2 * Mp * Kp * Coutp,
            transcendentals=0,
            bytes_accessed=(Mp * Kp * 2 + Kp * Coutp * 2
                            + Mp * Coutp * 4 + 4 * Coutp * 4)),
    )
    y_raw, stats = pass1(patches_p, w_p, gamma_p, beta_p)

    # --- pass 2: elementwise y*scale + offset (+ ReLU), embarrassingly parallel ---
    if is_bn or is_relu:
        pass2 = pl.pallas_call(
            functools.partial(_bn_relu_kernel, is_relu=is_relu),
            out_shape=jax.ShapeDtypeStruct((Mp, Coutp), jnp.float32),
            grid=(n_tiles,),
            in_specs=[
                pl.BlockSpec((tile_m, Coutp), lambda i: (i, 0)),
                pl.BlockSpec((2, Coutp), lambda i: (0, 0)),
            ],
            out_specs=pl.BlockSpec((tile_m, Coutp), lambda i: (i, 0)),
            compiler_params=pltpu.CompilerParams(
                dimension_semantics=("parallel",),
                vmem_limit_bytes=64 * 1024 * 1024),
            cost_estimate=pl.CostEstimate(
                flops=2 * Mp * Coutp,
                transcendentals=0,
                bytes_accessed=2 * Mp * Coutp * 4 + 2 * Coutp * 4),
        )
        out = pass2(y_raw, stats)
    else:
        out = y_raw

    out = out[:M, :Cout].reshape(N, H_out, W_out, Cout)
    return jnp.transpose(out, (0, 3, 1, 2))                       # back to NCHW


def _reference(x, weight, gamma, beta):
    y = jax.lax.conv_general_dilated(
        x, weight, window_strides=(1, 1), padding=((1, 1), (1, 1)),
        dimension_numbers=("NCHW", "OIHW", "NCHW"))
    mean = jnp.mean(y, axis=(0, 2, 3), keepdims=True)
    var = jnp.var(y, axis=(0, 2, 3), keepdims=True)               # biased, like BN train
    y = (y - mean) / jnp.sqrt(var + BN_EPS)
    y = y * gamma.reshape(1, -1, 1, 1) + beta.reshape(1, -1, 1, 1)
    return jnp.maximum(y, 0.0)


if __name__ == "__main__":
    key = jax.random.PRNGKey(0)
    k_x, k_w, k_g, k_b = jax.random.split(key, 4)

    N, Cin, H, W = 2, 4, 16, 16
    Cout, KH, KW = 8, 3, 3

    x = jax.random.normal(k_x, (N, Cin, H, W), dtype=jnp.float32)
    # deterministic synthetic parameters (not a checkpoint load)
    weight = 0.1 * jax.random.normal(k_w, (Cout, Cin, KH, KW), dtype=jnp.float32)
    gamma = 1.0 + 0.1 * jax.random.normal(k_g, (Cout,), dtype=jnp.float32)
    beta = 0.05 * jax.random.normal(k_b, (Cout,), dtype=jnp.float32)

    out = conv_bn_relu_2d(x, weight, gamma, beta)
    out = jax.block_until_ready(out)

    ref = _reference(x, weight, gamma, beta)
    assert out.shape == (N, Cout, H, W)
    # bf16 MXU inputs (f32 accumulation) -> compare at a loosened tolerance.
    assert jnp.allclose(out, ref, atol=5e-2, rtol=5e-2), float(jnp.max(jnp.abs(out - ref)))

    print("KERNEL_OK")
</pallas_src>

<mosaic_0001>
module attributes {stable_mosaic.version = 11 : i64} {
  func.func @_conv_stats_kernel(%arg0: i32, %arg1: memref<256x128xbf16, #tpu.memory_space<vmem>>, %arg2: memref<128x128xbf16, #tpu.memory_space<vmem>>, %arg3: memref<1x128xf32, #tpu.memory_space<vmem>>, %arg4: memref<1x128xf32, #tpu.memory_space<vmem>>, %arg5: memref<256x128xf32, #tpu.memory_space<vmem>>, %arg6: memref<2x128xf32, #tpu.memory_space<vmem>>) attributes {dimension_semantics = [#tpu.dimension_semantics<arbitrary>], iteration_bounds = array<i64: 2>, scalar_prefetch = 0 : i64, scratch_operands = 0 : i64, tpu.core_type = #tpu.core_type<tc>, window_params = [{transform_indices = @transform_0, window_bounds = array<i64: 256, 128>}, {pipeline_mode = #tpu.pipeline_mode<synchronous>, transform_indices = @transform_1, window_bounds = array<i64: 128, 128>}, {pipeline_mode = #tpu.pipeline_mode<synchronous>, transform_indices = @transform_2, window_bounds = array<i64: 1, 128>}, {pipeline_mode = #tpu.pipeline_mode<synchronous>, transform_indices = @transform_3, window_bounds = array<i64: 1, 128>}, {transform_indices = @transform_4, window_bounds = array<i64: 256, 128>}, {pipeline_mode = #tpu.pipeline_mode<synchronous>, transform_indices = @transform_5, window_bounds = array<i64: 2, 128>}]} {
    %c0 = arith.constant 0 : index
    %c0_0 = arith.constant 0 : index
    %0 = vector.load %arg1[%c0, %c0_0] : memref<256x128xbf16, #tpu.memory_space<vmem>>, vector<256x128xbf16>
    %c0_1 = arith.constant 0 : index
    %c0_2 = arith.constant 0 : index
    %1 = vector.load %arg2[%c0_1, %c0_2] : memref<128x128xbf16, #tpu.memory_space<vmem>>, vector<128x128xbf16>
    %cst = arith.constant dense<0.000000e+00> : vector<256x128xf32>
    %2 = tpu.matmul %0, %1, %cst {dimension_numbers = #tpu.dot_dimension_numbers<[1], [0], [0], [1], [0, 0, 1, 1], [], []>} : vector<256x128xbf16>, vector<128x128xbf16>, vector<256x128xf32> -> vector<256x128xf32>
    %c0_3 = arith.constant 0 : index
    %c0_4 = arith.constant 0 : index
    %3 = vector.load %arg5[%c0_3, %c0_4] : memref<256x128xf32, #tpu.memory_space<vmem>>, vector<256x128xf32>
    tpu.vector_store %arg5[%c0_3, %c0_4], %2 {strides = array<i32>} : memref<256x128xf32, #tpu.memory_space<vmem>>, vector<256x128xf32>,
    %c0_i32 = arith.constant 0 : i32
    %4 = arith.cmpi eq, %arg0, %c0_i32 : i32
    %5 = arith.extui %4 : i1 to i32
    %c0_i32_5 = arith.constant 0 : i32
    %6 = arith.cmpi ne, %5, %c0_i32_5 : i32
    scf.if %6 {
      %cst_16 = arith.constant 0.000000e+00 : f32
      %21 = vector.broadcast %cst_16 : f32 to vector<2x128xf32>
      %c0_17 = arith.constant 0 : index
      %c0_18 = arith.constant 0 : index
      %22 = vector.load %arg6[%c0_17, %c0_18] : memref<2x128xf32, #tpu.memory_space<vmem>>, vector<2x128xf32>
      tpu.vector_store %arg6[%c0_17, %c0_18], %21 {strides = array<i32>} : memref<2x128xf32, #tpu.memory_space<vmem>>, vector<2x128xf32>,
    } else {
    }
    %c0_6 = arith.constant 0 : index
    %c0_7 = arith.constant 0 : index
    %7 = vector.load %arg6[%c0_6, %c0_7] : memref<2x128xf32, #tpu.memory_space<vmem>>, vector<1x128xf32>
    %cst_8 = arith.constant dense<0.000000e+00> : vector<128xf32>
    %8 = vector.multi_reduction <add>, %2, %cst_8 [0] : vector<256x128xf32> to vector<128xf32>
    %9 = vector.shape_cast %8 : vector<128xf32> to vector<1x128xf32>
    %10 = arith.addf %7, %9 : vector<1x128xf32>
    %c0_9 = arith.constant 0 : index
    %c0_10 = arith.constant 0 : index
    %11 = vector.load %arg6[%c0_9, %c0_10] : memref<2x128xf32, #tpu.memory_space<vmem>>, vector<1x128xf32>
    tpu.vector_store %arg6[%c0_9, %c0_10], %10 {strides = array<i32>} : memref<2x128xf32, #tpu.memory_space<vmem>>, vector<1x128xf32>,
    %c1 = arith.constant 1 : index
    %c0_11 = arith.constant 0 : index
    %12 = vector.load %arg6[%c1, %c0_11] : memref<2x128xf32, #tpu.memory_space<vmem>>, vector<1x128xf32>
    %13 = arith.mulf %2, %2 : vector<256x128xf32>
    %cst_12 = arith.constant dense<0.000000e+00> : vector<128xf32>
    %14 = vector.multi_reduction <add>, %13, %cst_12 [0] : vector<256x128xf32> to vector<128xf32>
    %15 = vector.shape_cast %14 : vector<128xf32> to vector<1x128xf32>
    %16 = arith.addf %12, %15 : vector<1x128xf32>
    %c1_13 = arith.constant 1 : index
    %c0_14 = arith.constant 0 : index
    %17 = vector.load %arg6[%c1_13, %c0_14] : memref<2x128xf32, #tpu.memory_space<vmem>>, vector<1x128xf32>
    tpu.vector_store %arg6[%c1_13, %c0_14], %16 {strides = array<i32>} : memref<2x128xf32, #tpu.memory_space<vmem>>, vector<1x128xf32>,
    %c1_i32 = arith.constant 1 : i32
    %18 = arith.cmpi eq, %arg0, %c1_i32 : i32
    %19 = arith.extui %18 : i1 to i32
    %c0_i32_15 = arith.constant 0 : i32
    %20 = arith.cmpi ne, %19, %c0_i32_15 : i32
    scf.if %20 {
      %c0_16 = arith.constant 0 : index
      %c0_17 = arith.constant 0 : index
      %21 = vector.load %arg6[%c0_16, %c0_17] : memref<2x128xf32, #tpu.memory_space<vmem>>, vector<1x128xf32>
      %cst_18 = arith.constant 0.001953125 : f32
      %22 = vector.broadcast %cst_18 : f32 to vector<1x128xf32>
      %23 = arith.mulf %21, %22 : vector<1x128xf32>
      %c1_19 = arith.constant 1 : index
      %c0_20 = arith.constant 0 : index
      %24 = vector.load %arg6[%c1_19, %c0_20] : memref<2x128xf32, #tpu.memory_space<vmem>>, vector<1x128xf32>
      %cst_21 = arith.constant 0.001953125 : f32
      %25 = vector.broadcast %cst_21 : f32 to vector<1x128xf32>
      %26 = arith.mulf %24, %25 : vector<1x128xf32>
      %27 = arith.mulf %23, %23 : vector<1x128xf32>
      %28 = arith.subf %26, %27 : vector<1x128xf32>
      %cst_22 = arith.constant 0.000000e+00 : f32
      %29 = vector.broadcast %cst_22 : f32 to vector<1x128xf32>
      %30 = arith.maximumf %28, %29 : vector<1x128xf32>
      %c0_23 = arith.constant 0 : index
      %c0_24 = arith.constant 0 : index
      %31 = vector.load %arg3[%c0_23, %c0_24] : memref<1x128xf32, #tpu.memory_space<vmem>>, vector<1x128xf32>
      %cst_25 = arith.constant 9.99999974E-5 : f32
      %32 = vector.broadcast %cst_25 : f32 to vector<1x128xf32>
      %33 = arith.addf %30, %32 : vector<1x128xf32>
      %34 = math.rsqrt %33 : vector<1x128xf32>
      %35 = arith.mulf %31, %34 : vector<1x128xf32>
      %c0_26 = arith.constant 0 : index
      %c0_27 = arith.constant 0 : index
      %36 = vector.load %arg4[%c0_26, %c0_27] : memref<1x128xf32, #tpu.memory_space<vmem>>, vector<1x128xf32>
      %37 = arith.mulf %23, %35 : vector<1x128xf32>
      %38 = arith.subf %36, %37 : vector<1x128xf32>
      %c0_28 = arith.constant 0 : index
      %c0_29 = arith.constant 0 : index
      %39 = vector.load %arg6[%c0_28, %c0_29] : memref<2x128xf32, #tpu.memory_space<vmem>>, vector<1x128xf32>
      tpu.vector_store %arg6[%c0_28, %c0_29], %35 {strides = array<i32>} : memref<2x128xf32, #tpu.memory_space<vmem>>, vector<1x128xf32>,
      %c1_30 = arith.constant 1 : index
      %c0_31 = arith.constant 0 : index
      %40 = vector.load %arg6[%c1_30, %c0_31] : memref<2x128xf32, #tpu.memory_space<vmem>>, vector<1x128xf32>
      tpu.vector_store %arg6[%c1_30, %c0_31], %38 {strides = array<i32>} : memref<2x128xf32, #tpu.memory_space<vmem>>, vector<1x128xf32>,
    } else {
    }
    return
  }
  func.func @transform_0(%arg0: i32) -> (i32, i32) {
    %c0_i32 = arith.constant 0 : i32
    %c0_i32_0 = arith.constant 0 : i32
    return %arg0, %c0_i32 : i32, i32
  }
  func.func @transform_1(%arg0: i32) -> (i32, i32) {
    %c0_i32 = arith.constant 0 : i32
    %c0_i32_0 = arith.constant 0 : i32
    %c0_i32_1 = arith.constant 0 : i32
    return %c0_i32, %c0_i32_0 : i32, i32
  }
  func.func @transform_2(%arg0: i32) -> (i32, i32) {
    %c0_i32 = arith.constant 0 : i32
    %c0_i32_0 = arith.constant 0 : i32
    %c0_i32_1 = arith.constant 0 : i32
    return %c0_i32, %c0_i32_0 : i32, i32
  }
  func.func @transform_3(%arg0: i32) -> (i32, i32) {
    %c0_i32 = arith.constant 0 : i32
    %c0_i32_0 = arith.constant 0 : i32
    %c0_i32_1 = arith.constant 0 : i32
    return %c0_i32, %c0_i32_0 : i32, i32
  }
  func.func @transform_4(%arg0: i32) -> (i32, i32) {
    %c0_i32 = arith.constant 0 : i32
    %c0_i32_0 = arith.constant 0 : i32
    return %arg0, %c0_i32 : i32, i32
  }
  func.func @transform_5(%arg0: i32) -> (i32, i32) {
    %c0_i32 = arith.constant 0 : i32
    %c0_i32_0 = arith.constant 0 : i32
    %c0_i32_1 = arith.constant 0 : i32
    return %c0_i32, %c0_i32_0 : i32, i32
  }
}

</mosaic_0001>

<llo_original>
// kernel: tpu_custom_call.1
$region0: #{tpu_custom_call.1}
  #allocation0 [shape = 'u32[]', space=smem, size = 0x4, offset = 0x4, fixed_abs, tag = 'smem constant byte address 0x4 - core index']
  #allocation1 [shape = 'u32[72,128]{1,0:T(1,128)}', space=vmem, size = 0x9000, scoped, tag = 'internal scratch']
  %s0 = inlined_call_operand.hbm [shape: bf16[512,128], index: 0, kind: input, shape index: {}]
  %s1 = inlined_call_operand.hbm [shape: bf16[128,128], index: 1, kind: input, shape index: {}]
  %s2 = inlined_call_operand.vmem [shape: f32[1,128], index: 2, kind: input, shape index: {}]
  %s3 = inlined_call_operand.vmem [shape: f32[1,128], index: 3, kind: input, shape index: {}]
  %s4 = inlined_call_operand.hbm [shape: f32[512,128], index: 4, kind: output, shape index: {0}]
  %s5 = inlined_call_operand.hbm [shape: f32[2,128], index: 5, kind: output, shape index: {1}]
  %6 = xla_tuple %s4, %s5
  %s7 = sld [smem:[#allocation0]]
  $region73: #{tpu_custom_call.1} parent=0
    _
  %s9 = ssub.s32 1, %s7
  %s10 = scalar_select 0, %s9, %s7
  $region1: #{tpu_custom_call.1} parent=0
    #allocation2 [shape = 'u8[131072]{0}', space=vmem, size = 0x20000, scoped, tag = 'input window, operand 0']
    #allocation3 [shape = 's32[2]{0}', space=sflag, size = 0x8, scoped, tag = 'scoped memory for tpu_custom_call.1']
    #allocation4 [shape = 's32[2]{0}', space=sflag, size = 0x8, scoped, tag = 'scoped memory for tpu_custom_call.1']
    #allocation5 [shape = 'u8[32768]{0}', space=vmem, size = 0x8000, scoped, tag = 'input window, operand 1, single buffered']
    #allocation6 [shape = 's32[1]{0}', space=sflag, size = 0x4, scoped, tag = 'scoped memory for tpu_custom_call.1']
    #allocation7 [shape = 'u8[262144]{0}', space=vmem, size = 0x40000, scoped, tag = 'output window, operand 0']
    #allocation8 [shape = 'u8[1024]{0}', space=vmem, size = 0x400, scoped, tag = 'output window, operand 1, single buffered']
    #allocation9 [shape = 's32[1]{0}', space=sflag, size = 0x4, scoped, tag = 'scoped memory for tpu_custom_call.1']
    %11 = vsyncpa [#allocation3], 0
    %s12 = scalar_lea.sflag [#allocation3], 1
    %13 = vsyncpa %s12, 0
    %14 = vsyncpa [#allocation6], 0
    %15 = vsyncpa [#allocation4], 0
    %s16 = scalar_lea.sflag [#allocation4], 1
    %17 = vsyncpa %s16, 0
    %18 = vsyncpa [#allocation9], 0
    loop: start=0, step=1, limit=4
    $region2: #{tpu_custom_call.1} parent=1 // loop_pre_header
      _
    $region3: #{tpu_custom_call.1} parent=1 // loop_header
      %s20 = sphi 0, %s24
      %p21 = scmp.ge.s32.totalorder %s20, 4
      %s30 = sphi 0, %s32
      %s33 = sphi 0, %s30
      %s34 = sphi 0, %s33
      %s50 = sphi 0, %s34
      %s54 = sphi 0, %s54
      %s56 = sphi 0, %s54
      %s57 = sphi 0, %s56
      %s71 = sphi 0, %s57
      %s75 = sphi 0, %s75
      %s77 = sphi 0, %s75
      %s78 = sphi 0, %s77
      %s92 = sphi 0, %s78
      %s96 = sphi 0, %s96
      %s98 = sphi 0, %s96
      %s99 = sphi 0, %s98
      %s113 = sphi 0, %s99
      %s119 = sphi 0, %s121
      %s122 = sphi 0, %s119
      %s123 = sphi 0, %s122
      %s139 = sphi 0, %s123
      %s143 = sphi 0, %s143
      %s145 = sphi 0, %s143
      %s146 = sphi 0, %s145
      %s160 = sphi 0, %s146
    $region4: #{tpu_custom_call.1} parent=1 // loop_header_branch
      %23 = sbr.rel (%p21) target = $region8
    $region5: #{tpu_custom_call.1} parent=1 // loop_body
      %s25 = ssub.s32 %s20, 1
      %s26 = ssub.s32 %s20, 2
      %s27 = sadd.s32 %s20, 1
      %s28 = ssub.s32 %s20, %s27
      %p29 = scmp.eq.s32.totalorder %s28, 0
      %s31 = sadd.s32 %s30, 1
      %s32 = scalar_select %p29, %s30, %s31
      %p35 = pneg %p29
      %p36 = scmp.eq.s32.totalorder %s20, 1
      %p37 = por %p35, %p36
      %p38 = scmp.ne.s32.totalorder %s30, %s33
      %p39 = scmp.eq.s32.totalorder %s20, 0
      %p40 = por %p38, %p39
      %p41 = scmp.ne.s32.totalorder %s30, %s33
      %p42 = scmp.eq.s32.totalorder %s25, 1
      %p43 = por %p41, %p42
      %p44 = scmp.ne.s32.totalorder %s33, %s34
      %p45 = scmp.eq.s32.totalorder %s25, 0
      %p46 = por %p44, %p45
      %p47 = scmp.ne.s32.totalorder %s33, %s34
      %p48 = scmp.eq.s32.totalorder %s26, 1
      %p49 = por %p47, %p48
      %p51 = scmp.ne.s32.totalorder %s34, %s50
      %p52 = scmp.eq.s32.totalorder %s26, 0
      %p53 = por %p51, %p52
      %s55 = sadd.s32 %s54, 1
      %p58 = scmp.eq.s32.totalorder %s20, 1
      %p59 = scmp.ne.s32.totalorder %s54, %s56
      %p60 = scmp.eq.s32.totalorder %s20, 0
      %p61 = por %p59, %p60
      %p62 = scmp.ne.s32.totalorder %s54, %s56
      %p63 = scmp.eq.s32.totalorder %s25, 1
      %p64 = por %p62, %p63
      %p65 = scmp.ne.s32.totalorder %s56, %s57
      %p66 = scmp.eq.s32.totalorder %s25, 0
      %p67 = por %p65, %p66
      %p68 = scmp.ne.s32.totalorder %s56, %s57
      %p69 = scmp.eq.s32.totalorder %s26, 1
      %p70 = por %p68, %p69
      %p72 = scmp.ne.s32.totalorder %s57, %s71
      %p73 = scmp.eq.s32.totalorder %s26, 0
      %p74 = por %p72, %p73
      %s76 = sadd.s32 %s75, 1
      %p79 = scmp.eq.s32.totalorder %s20, 1
      %p80 = scmp.ne.s32.totalorder %s75, %s77
      %p81 = scmp.eq.s32.totalorder %s20, 0
      %p82 = por %p80, %p81
      %p83 = scmp.ne.s32.totalorder %s75, %s77
      %p84 = scmp.eq.s32.totalorder %s25, 1
      %p85 = por %p83, %p84
      %p86 = scmp.ne.s32.totalorder %s77, %s78
      %p87 = scmp.eq.s32.totalorder %s25, 0
      %p88 = por %p86, %p87
      %p89 = scmp.ne.s32.totalorder %s77, %s78
      %p90 = scmp.eq.s32.totalorder %s26, 1
      %p91 = por %p89, %p90
      %p93 = scmp.ne.s32.totalorder %s78, %s92
      %p94 = scmp.eq.s32.totalorder %s26, 0
      %p95 = por %p93, %p94
      %s97 = sadd.s32 %s96, 1
      %p100 = scmp.eq.s32.totalorder %s20, 1
      %p101 = scmp.ne.s32.totalorder %s96, %s98
      %p102 = scmp.eq.s32.totalorder %s20, 0
      %p103 = por %p101, %p102
      %p104 = scmp.ne.s32.totalorder %s96, %s98
      %p105 = scmp.eq.s32.totalorder %s25, 1
      %p106 = por %p104, %p105
      %p107 = scmp.ne.s32.totalorder %s98, %s99
      %p108 = scmp.eq.s32.totalorder %s25, 0
      %p109 = por %p107, %p108
      %p110 = scmp.ne.s32.totalorder %s98, %s99
      %p111 = scmp.eq.s32.totalorder %s26, 1
      %p112 = por %p110, %p111
      %p114 = scmp.ne.s32.totalorder %s99, %s113
      %p115 = scmp.eq.s32.totalorder %s26, 0
      %p116 = por %p114, %p115
      %s117 = ssub.s32 %s20, %s27
      %p118 = scmp.eq.s32.totalorder %s117, 0
      %s120 = sadd.s32 %s119, 1
      %s121 = scalar_select %p118, %s119, %s120
      %p124 = pneg %p118
      %p125 = scmp.eq.s32.totalorder %s20, 1
      %p126 = por %p124, %p125
      %p127 = scmp.ne.s32.totalorder %s119, %s122
      %p128 = scmp.eq.s32.totalorder %s20, 0
      %p129 = por %p127, %p128
      %p130 = scmp.ne.s32.totalorder %s119, %s122
      %p131 = scmp.eq.s32.totalorder %s25, 1
      %p132 = por %p130, %p131
      %p133 = scmp.ne.s32.totalorder %s122, %s123
      %p134 = scmp.eq.s32.totalorder %s25, 0
      %p135 = por %p133, %p134
      %p136 = scmp.ne.s32.totalorder %s122, %s123
      %p137 = scmp.eq.s32.totalorder %s26, 1
      %p138 = por %p136, %p137
      %p140 = scmp.ne.s32.totalorder %s123, %s139
      %p141 = scmp.eq.s32.totalorder %s26, 0
      %p142 = por %p140, %p141
      %s144 = sadd.s32 %s143, 1
      %p147 = scmp.eq.s32.totalorder %s20, 1
      %p148 = scmp.ne.s32.totalorder %s143, %s145
      %p149 = scmp.eq.s32.totalorder %s20, 0
      %p150 = por %p148, %p149
      %p151 = scmp.ne.s32.totalorder %s143, %s145
      %p152 = scmp.eq.s32.totalorder %s25, 1
      %p153 = por %p151, %p152
      %p154 = scmp.ne.s32.totalorder %s145, %s146
      %p155 = scmp.eq.s32.totalorder %s25, 0
      %p156 = por %p154, %p155
      %p157 = scmp.ne.s32.totalorder %s145, %s146
      %p158 = scmp.eq.s32.totalorder %s26, 1
      %p159 = por %p157, %p158
      %p161 = scmp.ne.s32.totalorder %s146, %s160
      %p162 = scmp.eq.s32.totalorder %s26, 0
      %p163 = por %p161, %p162
      %p164 = scmp.le.s32.totalorder 1, %s20
      %p165 = scmp.lt.s32.totalorder %s20, 3
      %p166 = pnand %p164, %p165
      %p167 = pneg %p166
      // Predicated region
      $region9: #{tpu_custom_call.1} parent=5 // pred_check
        _
      $region10: #{tpu_custom_call.1} parent=5 // pred_check_branch
        %169 = sbr.rel (%p166) target = $region12
      $region11: #{tpu_custom_call.1} parent=5 // pred_region
        %s170 = ssub.s32 %s20, 1
        // Predicated region
        $region13: #{tpu_custom_call.1} parent=11 // pred_check
          %p171 = pneg %p67
        $region14: #{tpu_custom_call.1} parent=11 // pred_check_branch
          %173 = sbr.rel (%p171) target = $region16
        $region15: #{tpu_custom_call.1} parent=11 // pred_region
          %175 = vsyncadd [#allocation6], 0
          %s176 = sshll.u32 %s1, 4
          %s177 = int_to_ptr.hbm [resolvable:$true] %s176
          %s178 = sshll.u32 [#allocation5], 4
          %s179 = int_to_ptr.vmem [resolvable:$true] %s178
          %184 = dma.hbm_to_vmem [thread:$0]  %s177, 1024, %s179, [#allocation6], 64, 64, 4
        $region16: #{tpu_custom_call.1} parent=11 // pred_fallthru
          _
        // Predicated region
        $region17: #{tpu_custom_call.1} parent=11 // pred_check
          %p185 = pneg %p88
        $region18: #{tpu_custom_call.1} parent=11 // pred_check_branch
          %187 = sbr.rel (%p185) target = $region20
        $region19: #{tpu_custom_call.1} parent=11 // pred_region
          _
        $region20: #{tpu_custom_call.1} parent=11 // pred_fallthru
          _
        // Predicated region
        $region21: #{tpu_custom_call.1} parent=11 // pred_check
          %p188 = pneg %p109
        $region22: #{tpu_custom_call.1} parent=11 // pred_check_branch
          %190 = sbr.rel (%p188) target = $region24
        $region23: #{tpu_custom_call.1} parent=11 // pred_region
          _
        $region24: #{tpu_custom_call.1} parent=11 // pred_fallthru
          _
      $region12: #{tpu_custom_call.1} parent=5 // pred_fallthru
        _
      %p191 = scmp.lt.s32.totalorder %s20, 2
      // Predicated region
      $region25: #{tpu_custom_call.1} parent=5 // pred_check
        %p192 = pneg %p191
      $region26: #{tpu_custom_call.1} parent=5 // pred_check_branch
        %194 = sbr.rel (%p192) target = $region28
      $region27: #{tpu_custom_call.1} parent=5 // pred_region
        // Predicated region
        $region29: #{tpu_custom_call.1} parent=27 // pred_check
          %p195 = pneg %p40
        $region30: #{tpu_custom_call.1} parent=27 // pred_check_branch
          %197 = sbr.rel (%p195) target = $region32
        $region31: #{tpu_custom_call.1} parent=27 // pred_region
          %s198 = sand.u32 %s30, 1
          %s199 = scalar_lea.sflag [#allocation3], %s198
          %s200 = sand.u32 %s30, 1
          %s201 = smul.addr %s200, 128
          %s202 = scalar_lea.vmem [#allocation2], %s201
          %s203 = smul.u32 32, %s20
          %205 = vsyncadd %s199, 0
          %s206 = smul.addr %s203, 4
          %s207 = scalar_lea.hbm %s0, %s206
          %s208 = sshll.u32 %s207, 4
          %s209 = int_to_ptr.hbm [resolvable:$true] %s208
          %s210 = sshll.u32 %s202, 4
          %s211 = int_to_ptr.vmem [resolvable:$true] %s210
          %216 = dma.hbm_to_vmem [thread:$0]  %s209, 2048, %s211, %s199, 64, 64, 4
        $region32: #{tpu_custom_call.1} parent=27 // pred_fallthru
          _
      $region28: #{tpu_custom_call.1} parent=5 // pred_fallthru
        _
      %p217 = scmp.le.s32.totalorder 1, %s20
      %p218 = scmp.lt.s32.totalorder %s20, 3
      %p219 = pnand %p217, %p218
      %p220 = pneg %p219
      // Predicated region
      $region33: #{tpu_custom_call.1} parent=5 // pred_check
        _
      $region34: #{tpu_custom_call.1} parent=5 // pred_check_branch
        %222 = sbr.rel (%p219) target = $region36
      $region35: #{tpu_custom_call.1} parent=5 // pred_region
        %s223 = ssub.s32 %s20, 1
        %s224 = sand.u32 %s33, 1
        %s225 = scalar_lea.sflag [#allocation3], %s224
        %s226 = sand.u32 %s33, 1
        %s227 = smul.addr %s226, 128
        %s228 = scalar_lea.vmem [#allocation2], %s227
        // Predicated region
        $region37: #{tpu_custom_call.1} parent=35 // pred_check
          %p229 = pneg %p46
        $region38: #{tpu_custom_call.1} parent=35 // pred_check_branch
          %231 = sbr.rel (%p229) target = $region40
        $region39: #{tpu_custom_call.1} parent=35 // pred_region
          %233 = dma.done %s225, 2048
        $region40: #{tpu_custom_call.1} parent=35 // pred_fallthru
          _
        // Predicated region
        $region41: #{tpu_custom_call.1} parent=35 // pred_check
          %p234 = pneg %p67
        $region42: #{tpu_custom_call.1} parent=35 // pred_check_branch
          %236 = sbr.rel (%p234) target = $region44
        $region43: #{tpu_custom_call.1} parent=35 // pred_region
          %238 = dma.done [#allocation6], 1024
        $region44: #{tpu_custom_call.1} parent=35 // pred_fallthru
          _
        %s239 = sand.u32 %s33, 1
        %s240 = scalar_lea.sflag [#allocation3], %s239
        %s241 = sand.u32 %s33, 1
        %s242 = smul.addr %s241, 128
        %s243 = scalar_lea.vmem [#allocation2], %s242
        %p244 = pneg %p46
        %p245 = pneg %p43
        %p246 = pneg %p67
        %p247 = pneg %p64
        %p248 = pneg %p88
        %p249 = pneg %p85
        %p250 = pneg %p109
        %p251 = pneg %p106
        %p252 = pneg %p135
        %p253 = pneg %p132
        %s254 = sand.u32 %s122, 1
        %s255 = scalar_lea.sflag [#allocation4], %s254
        %s256 = sand.u32 %s122, 1
        %s257 = smul.addr %s256, 256
        %s258 = scalar_lea.vmem [#allocation7], %s257
        %p259 = pneg %p156
        %p260 = pneg %p153
        %s261 = smul.u32 32, %s25
        %s262 = smul.u32 32, %s25
        %v263 = vld [vmem:[%s228] sm:$0xf]
        %v264 = vld [vmem:[%s228 + $0x4] sm:$0xf]
        %v265 = vld [vmem:[%s228 + $0x8] sm:$0xf]
        %v266 = vld [vmem:[%s228 + $0xc] sm:$0xf]
        %v267 = vld [vmem:[%s228 + $0x10] sm:$0xf]
        %v268 = vld [vmem:[%s228 + $0x14] sm:$0xf]
        %v269 = vld [vmem:[%s228 + $0x18] sm:$0xf]
        %v270 = vld [vmem:[%s228 + $0x1c] sm:$0xf]
        %v271 = vld [vmem:[%s228 + $0x20] sm:$0xf]
        %v272 = vld [vmem:[%s228 + $0x24] sm:$0xf]
        %v273 = vld [vmem:[%s228 + $0x28] sm:$0xf]
        %v274 = vld [vmem:[%s228 + $0x2c] sm:$0xf]
        %v275 = vld [vmem:[%s228 + $0x30] sm:$0xf]
        %v276 = vld [vmem:[%s228 + $0x34] sm:$0xf]
        %v277 = vld [vmem:[%s228 + $0x38] sm:$0xf]
        %v278 = vld [vmem:[%s228 + $0x3c] sm:$0xf]
        %v279 = vld [vmem:[%s228 + $0x40] sm:$0xf]
        %v280 = vld [vmem:[%s228 + $0x44] sm:$0xf]
        %v281 = vld [vmem:[%s228 + $0x48] sm:$0xf]
        %v282 = vld [vmem:[%s228 + $0x4c] sm:$0xf]
        %v283 = vld [vmem:[%s228 + $0x50] sm:$0xf]
        %v284 = vld [vmem:[%s228 + $0x54] sm:$0xf]
        %v285 = vld [vmem:[%s228 + $0x58] sm:$0xf]
        %v286 = vld [vmem:[%s228 + $0x5c] sm:$0xf]
        %v287 = vld [vmem:[%s228 + $0x60] sm:$0xf]
        %v288 = vld [vmem:[%s228 + $0x64] sm:$0xf]
        %v289 = vld [vmem:[%s228 + $0x68] sm:$0xf]
        %v290 = vld [vmem:[%s228 + $0x6c] sm:$0xf]
        %v291 = vld [vmem:[%s228 + $0x70] sm:$0xf]
        %v292 = vld [vmem:[%s228 + $0x74] sm:$0xf]
        %v293 = vld [vmem:[%s228 + $0x78] sm:$0xf]
        %v294 = vld [vmem:[%s228 + $0x7c] sm:$0xf]
        %v295 = vld [vmem:[#allocation5] sm:$0xf]
        %v296 = vld [vmem:[#allocation5 + $0x4] sm:$0xf]
        %v297 = vld [vmem:[#allocation5 + $0x8] sm:$0xf]
        %v298 = vld [vmem:[#allocation5 + $0xc] sm:$0xf]
        %v299 = vld [vmem:[#allocation5 + $0x10] sm:$0xf]
        %v300 = vld [vmem:[#allocation5 + $0x14] sm:$0xf]
        %v301 = vld [vmem:[#allocation5 + $0x18] sm:$0xf]
        %v302 = vld [vmem:[#allocation5 + $0x1c] sm:$0xf]
        %v303 = vld [vmem:[#allocation5 + $0x20] sm:$0xf]
        %v304 = vld [vmem:[#allocation5 + $0x24] sm:$0xf]
        %v305 = vld [vmem:[#allocation5 + $0x28] sm:$0xf]
        %v306 = vld [vmem:[#allocation5 + $0x2c] sm:$0xf]
        %v307 = vld [vmem:[#allocation5 + $0x30] sm:$0xf]
        %v308 = vld [vmem:[#allocation5 + $0x34] sm:$0xf]
        %v309 = vld [vmem:[#allocation5 + $0x38] sm:$0xf]
        %v310 = vld [vmem:[#allocation5 + $0x3c] sm:$0xf]
        %v343 = vunpack.c.l.b16 %v263
        %v344 = vunpack.c.l.b16 %v264
        %v345 = vunpack.c.l.b16 %v265
        %v346 = vunpack.c.l.b16 %v266
        %v347 = vunpack.c.l.b16 %v267
        %v348 = vunpack.c.l.b16 %v268
        %v349 = vunpack.c.l.b16 %v269
        %v350 = vunpack.c.l.b16 %v270
        %v351 = vunpack.c.l.b16 %v271
        %v352 = vunpack.c.l.b16 %v272
        %v353 = vunpack.c.l.b16 %v273
        %v354 = vunpack.c.l.b16 %v274
        %v355 = vunpack.c.l.b16 %v275
        %v356 = vunpack.c.l.b16 %v276
        %v357 = vunpack.c.l.b16 %v277
        %v358 = vunpack.c.l.b16 %v278
        %v359 = vunpack.c.l.b16 %v279
        %v360 = vunpack.c.l.b16 %v280
        %v361 = vunpack.c.l.b16 %v281
        %v362 = vunpack.c.l.b16 %v282
        %v363 = vunpack.c.l.b16 %v283
        %v364 = vunpack.c.l.b16 %v284
        %v365 = vunpack.c.l.b16 %v285
        %v366 = vunpack.c.l.b16 %v286
        %v367 = vunpack.c.l.b16 %v287
        %v368 = vunpack.c.l.b16 %v288
        %v369 = vunpack.c.l.b16 %v289
        %v370 = vunpack.c.l.b16 %v290
        %v371 = vunpack.c.l.b16 %v291
        %v372 = vunpack.c.l.b16 %v292
        %v373 = vunpack.c.l.b16 %v293
        %v374 = vunpack.c.l.b16 %v294
        %v375 = vpack.c.b16 %v344, %v343
        %v376 = vpack.c.b16 %v346, %v345
        %v377 = vpack.c.b16 %v348, %v347
        %v378 = vpack.c.b16 %v350, %v349
        %v379 = vpack.c.b16 %v352, %v351
        %v380 = vpack.c.b16 %v354, %v353
        %v381 = vpack.c.b16 %v356, %v355
        %v382 = vpack.c.b16 %v358, %v357
        %v383 = vpack.c.b16 %v360, %v359
        %v384 = vpack.c.b16 %v362, %v361
        %v385 = vpack.c.b16 %v364, %v363
        %v386 = vpack.c.b16 %v366, %v365
        %v387 = vpack.c.b16 %v368, %v367
        %v388 = vpack.c.b16 %v370, %v369
        %v389 = vpack.c.b16 %v372, %v371
        %v390 = vpack.c.b16 %v374, %v373
        %v423 = vunpack.c.l.b16 %v295
        %v424 = vunpack.c.l.b16 %v296
        %v425 = vunpack.c.l.b16 %v297
        %v426 = vunpack.c.l.b16 %v298
        %v427 = vunpack.c.l.b16 %v299
        %v428 = vunpack.c.l.b16 %v300
        %v429 = vunpack.c.l.b16 %v301
        %v430 = vunpack.c.l.b16 %v302
        %v431 = vunpack.c.l.b16 %v303
        %v432 = vunpack.c.l.b16 %v304
        %v433 = vunpack.c.l.b16 %v305
        %v434 = vunpack.c.l.b16 %v306
        %v435 = vunpack.c.l.b16 %v307
        %v436 = vunpack.c.l.b16 %v308
        %v437 = vunpack.c.l.b16 %v309
        %v438 = vunpack.c.l.b16 %v310
        %v439 = vpack.c.b16 %v424, %v423
        %v440 = vpack.c.b16 %v426, %v425
        %v441 = vpack.c.b16 %v428, %v427
        %v442 = vpack.c.b16 %v430, %v429
        %v443 = vpack.c.b16 %v432, %v431
        %v444 = vpack.c.b16 %v434, %v433
        %v445 = vpack.c.b16 %v436, %v435
        %v446 = vpack.c.b16 %v438, %v437
        %455 = vmatpush.bf16.msra.mxu0 %v446
        %456 = vmatpush.bf16.msra.mxu0 %v445
        %457 = vmatpush.bf16.msra.mxu0 %v444
        %458 = vmatpush.bf16.msra.mxu0 %v443
        %459 = vmatpush.bf16.msra.mxu0 %v442
        %460 = vmatpush.bf16.msra.mxu0 %v441
        %461 = vmatpush.bf16.msra.mxu0 %v440
        %462 = vmatpush.bf16.msra.mxu0 %v439
        %463 = vmatmul.bf16.gmra.mxu0 %v375
        %v464 = vpop.f32.mrf.mxu0
        %v465 = vadd.f32 0.0, %v464
        %v466 = vpop.f32.mrf.mxu0
        %v467 = vadd.f32 0.0, %v466
        %468 = vmatmul.bf16.gmra.mxu0 %v376
        %v469 = vpop.f32.mrf.mxu0
        %v470 = vadd.f32 0.0, %v469
        %v471 = vpop.f32.mrf.mxu0
        %v472 = vadd.f32 0.0, %v471
        %473 = vmatmul.bf16.gmra.mxu0 %v377
        %v474 = vpop.f32.mrf.mxu0
        %v475 = vadd.f32 0.0, %v474
        %v476 = vpop.f32.mrf.mxu0
        %v477 = vadd.f32 0.0, %v476
        %478 = vmatmul.bf16.gmra.mxu0 %v378
        %v479 = vpop.f32.mrf.mxu0
        %v480 = vadd.f32 0.0, %v479
        %v481 = vpop.f32.mrf.mxu0
        %v482 = vadd.f32 0.0, %v481
        %483 = vmatmul.bf16.gmra.mxu0 %v379
        %v484 = vpop.f32.mrf.mxu0
        %v485 = vadd.f32 0.0, %v484
        %v486 = vpop.f32.mrf.mxu0
        %v487 = vadd.f32 0.0, %v486
        %488 = vmatmul.bf16.gmra.mxu0 %v380
        %v489 = vpop.f32.mrf.mxu0
        %v490 = vadd.f32 0.0, %v489
        %v491 = vpop.f32.mrf.mxu0
        %v492 = vadd.f32 0.0, %v491
        %493 = vmatmul.bf16.gmra.mxu0 %v381
        %v494 = vpop.f32.mrf.mxu0
        %v495 = vadd.f32 0.0, %v494
        %v496 = vpop.f32.mrf.mxu0
        %v497 = vadd.f32 0.0, %v496
        %498 = vmatmul.bf16.gmra.mxu0 %v382
        %v499 = vpop.f32.mrf.mxu0
        %v500 = vadd.f32 0.0, %v499
        %v501 = vpop.f32.mrf.mxu0
        %v502 = vadd.f32 0.0, %v501
        %503 = vmatmul.bf16.gmra.mxu0 %v383
        %v504 = vpop.f32.mrf.mxu0
        %v505 = vadd.f32 0.0, %v504
        %v506 = vpop.f32.mrf.mxu0
        %v507 = vadd.f32 0.0, %v506
        %508 = vmatmul.bf16.gmra.mxu0 %v384
        %v509 = vpop.f32.mrf.mxu0
        %v510 = vadd.f32 0.0, %v509
        %v511 = vpop.f32.mrf.mxu0
        %v512 = vadd.f32 0.0, %v511
        %513 = vmatmul.bf16.gmra.mxu0 %v385
        %v514 = vpop.f32.mrf.mxu0
        %v515 = vadd.f32 0.0, %v514
        %v516 = vpop.f32.mrf.mxu0
        %v517 = vadd.f32 0.0, %v516
        %518 = vmatmul.bf16.gmra.mxu0 %v386
        %v519 = vpop.f32.mrf.mxu0
        %v520 = vadd.f32 0.0, %v519
        %v521 = vpop.f32.mrf.mxu0
        %v522 = vadd.f32 0.0, %v521
        %523 = vmatmul.bf16.gmra.mxu0 %v387
        %v524 = vpop.f32.mrf.mxu0
        %v525 = vadd.f32 0.0, %v524
        %v526 = vpop.f32.mrf.mxu0
        %v527 = vadd.f32 0.0, %v526
        %528 = vmatmul.bf16.gmra.mxu0 %v388
        %v529 = vpop.f32.mrf.mxu0
        %v530 = vadd.f32 0.0, %v529
        %v531 = vpop.f32.mrf.mxu0
        %v532 = vadd.f32 0.0, %v531
        %533 = vmatmul.bf16.gmra.mxu0 %v389
        %v534 = vpop.f32.mrf.mxu0
        %v535 = vadd.f32 0.0, %v534
        %v536 = vpop.f32.mrf.mxu0
        %v537 = vadd.f32 0.0, %v536
        %538 = vmatmul.bf16.gmra.mxu0 %v390
        %v539 = vpop.f32.mrf.mxu0
        %v540 = vadd.f32 0.0, %v539
        %v541 = vpop.f32.mrf.mxu0
        %v542 = vadd.f32 0.0, %v541
        %543 = vdwg.mxu0
        %544 = vst [vmem:[%s258] sm:$0xff] %v465
        %545 = vst [vmem:[%s258 + $0x8] sm:$0xff] %v467
        %546 = vst [vmem:[%s258 + $0x10] sm:$0xff] %v470
        %547 = vst [vmem:[%s258 + $0x18] sm:$0xff] %v472
        %548 = vst [vmem:[%s258 + $0x20] sm:$0xff] %v475
        %549 = vst [vmem:[%s258 + $0x28] sm:$0xff] %v477
        %550 = vst [vmem:[%s258 + $0x30] sm:$0xff] %v480
        %551 = vst [vmem:[%s258 + $0x38] sm:$0xff] %v482
        %552 = vst [vmem:[%s258 + $0x40] sm:$0xff] %v485
        %553 = vst [vmem:[%s258 + $0x48] sm:$0xff] %v487
        %554 = vst [vmem:[%s258 + $0x50] sm:$0xff] %v490
        %555 = vst [vmem:[%s258 + $0x58] sm:$0xff] %v492
        %556 = vst [vmem:[%s258 + $0x60] sm:$0xff] %v495
        %557 = vst [vmem:[%s258 + $0x68] sm:$0xff] %v497
        %558 = vst [vmem:[%s258 + $0x70] sm:$0xff] %v500
        %559 = vst [vmem:[%s258 + $0x78] sm:$0xff] %v502
        %560 = vst [vmem:[%s258 + $0x80] sm:$0xff] %v505
        %561 = vst [vmem:[%s258 + $0x88] sm:$0xff] %v507
        %562 = vst [vmem:[%s258 + $0x90] sm:$0xff] %v510
        %563 = vst [vmem:[%s258 + $0x98] sm:$0xff] %v512
        %564 = vst [vmem:[%s258 + $0xa0] sm:$0xff] %v515
        %565 = vst [vmem:[%s258 + $0xa8] sm:$0xff] %v517
        %566 = vst [vmem:[%s258 + $0xb0] sm:$0xff] %v520
        %567 = vst [vmem:[%s258 + $0xb8] sm:$0xff] %v522
        %568 = vst [vmem:[%s258 + $0xc0] sm:$0xff] %v525
        %569 = vst [vmem:[%s258 + $0xc8] sm:$0xff] %v527
        %570 = vst [vmem:[%s258 + $0xd0] sm:$0xff] %v530
        %571 = vst [vmem:[%s258 + $0xd8] sm:$0xff] %v532
        %572 = vst [vmem:[%s258 + $0xe0] sm:$0xff] %v535
        %573 = vst [vmem:[%s258 + $0xe8] sm:$0xff] %v537
        %574 = vst [vmem:[%s258 + $0xf0] sm:$0xff] %v540
        %575 = vst [vmem:[%s258 + $0xf8] sm:$0xff] %v542
        %p576 = scmp.eq.s32.totalorder %s25, 0
        // Predicated region
        $region45: #{tpu_custom_call.1} parent=35 // pred_check
          %p577 = pneg %p576
        $region46: #{tpu_custom_call.1} parent=35 // pred_check_branch
          %579 = sbr.rel (%p577) target = $region48
        $region47: #{tpu_custom_call.1} parent=35 // pred_region
          %580 = vst [vmem:[#allocation8] sm:$0x3] 0.0
        $region48: #{tpu_custom_call.1} parent=35 // pred_fallthru
          _
        %v581 = vld [vmem:[#allocation8] sm:$0x1]
        %v582 = vadd.f32 %v465, %v467
        %v583 = vadd.f32 %v582, %v470
        %v584 = vadd.f32 %v583, %v472
        %v585 = vadd.f32 %v584, %v475
        %v586 = vadd.f32 %v585, %v477
        %v587 = vadd.f32 %v586, %v480
        %v588 = vadd.f32 %v587, %v482
        %v589 = vadd.f32 %v588, %v485
        %v590 = vadd.f32 %v589, %v487
        %v591 = vadd.f32 %v590, %v490
        %v592 = vadd.f32 %v591, %v492
        %v593 = vadd.f32 %v592, %v495
        %v594 = vadd.f32 %v593, %v497
        %v595 = vadd.f32 %v594, %v500
        %v596 = vadd.f32 %v595, %v502
        %v597 = vadd.f32 %v596, %v505
        %v598 = vadd.f32 %v597, %v507
        %v599 = vadd.f32 %v598, %v510
        %v600 = vadd.f32 %v599, %v512
        %v601 = vadd.f32 %v600, %v515
        %v602 = vadd.f32 %v601, %v517
        %v603 = vadd.f32 %v602, %v520
        %v604 = vadd.f32 %v603, %v522
        %v605 = vadd.f32 %v604, %v525
        %v606 = vadd.f32 %v605, %v527
        %v607 = vadd.f32 %v606, %v530
        %v608 = vadd.f32 %v607, %v532
        %v609 = vadd.f32 %v608, %v535
        %v610 = vadd.f32 %v609, %v537
        %v611 = vadd.f32 %v610, %v540
        %v612 = vadd.f32 %v611, %v542
        %v613 = vrot.slane %v612, 4
        %v614 = vadd.f32 %v612, %v613
        %v615 = vrot.slane %v614, 2
        %v616 = vadd.f32 %v614, %v615
        %v617 = vrot.slane %v616, 1
        %v618 = vadd.f32 %v616, %v617
        %v619 = vadd.f32 %v581, %v618
        %620 = vst [vmem:[#allocation8] sm:$0x1] %v619
        %v621 = vld [vmem:[#allocation8 + $0x1] sm:$0x1]
        %v622 = vmul.f32 %v465, %v465
        %v623 = vmul.f32 %v467, %v467
        %v624 = vmul.f32 %v470, %v470
        %v625 = vmul.f32 %v472, %v472
        %v626 = vmul.f32 %v475, %v475
        %v627 = vmul.f32 %v477, %v477
        %v628 = vmul.f32 %v480, %v480
        %v629 = vmul.f32 %v482, %v482
        %v630 = vmul.f32 %v485, %v485
        %v631 = vmul.f32 %v487, %v487
        %v632 = vmul.f32 %v490, %v490
        %v633 = vmul.f32 %v492, %v492
        %v634 = vmul.f32 %v495, %v495
        %v635 = vmul.f32 %v497, %v497
        %v636 = vmul.f32 %v500, %v500
        %v637 = vmul.f32 %v502, %v502
        %v638 = vmul.f32 %v505, %v505
        %v639 = vmul.f32 %v507, %v507
        %v640 = vmul.f32 %v510, %v510
        %v641 = vmul.f32 %v512, %v512
        %v642 = vmul.f32 %v515, %v515
        %v643 = vmul.f32 %v517, %v517
        %v644 = vmul.f32 %v520, %v520
        %v645 = vmul.f32 %v522, %v522
        %v646 = vmul.f32 %v525, %v525
        %v647 = vmul.f32 %v527, %v527
        %v648 = vmul.f32 %v530, %v530
        %v649 = vmul.f32 %v532, %v532
        %v650 = vmul.f32 %v535, %v535
        %v651 = vmul.f32 %v537, %v537
        %v652 = vmul.f32 %v540, %v540
        %v653 = vmul.f32 %v542, %v542
        %v654 = vadd.f32 %v622, %v623
        %v655 = vadd.f32 %v654, %v624
        %v656 = vadd.f32 %v655, %v625
        %v657 = vadd.f32 %v656, %v626
        %v658 = vadd.f32 %v657, %v627
        %v659 = vadd.f32 %v658, %v628
        %v660 = vadd.f32 %v659, %v629
        %v661 = vadd.f32 %v660, %v630
        %v662 = vadd.f32 %v661, %v631
        %v663 = vadd.f32 %v662, %v632
        %v664 = vadd.f32 %v663, %v633
        %v665 = vadd.f32 %v664, %v634
        %v666 = vadd.f32 %v665, %v635
        %v667 = vadd.f32 %v666, %v636
        %v668 = vadd.f32 %v667, %v637
        %v669 = vadd.f32 %v668, %v638
        %v670 = vadd.f32 %v669, %v639
        %v671 = vadd.f32 %v670, %v640
        %v672 = vadd.f32 %v671, %v641
        %v673 = vadd.f32 %v672, %v642
        %v674 = vadd.f32 %v673, %v643
        %v675 = vadd.f32 %v674, %v644
        %v676 = vadd.f32 %v675, %v645
        %v677 = vadd.f32 %v676, %v646
        %v678 = vadd.f32 %v677, %v647
        %v679 = vadd.f32 %v678, %v648
        %v680 = vadd.f32 %v679, %v649
        %v681 = vadd.f32 %v680, %v650
        %v682 = vadd.f32 %v681, %v651
        %v683 = vadd.f32 %v682, %v652
        %v684 = vadd.f32 %v683, %v653
        %v685 = vrot.slane %v684, 4
        %v686 = vadd.f32 %v684, %v685
        %v687 = vrot.slane %v686, 2
        %v688 = vadd.f32 %v686, %v687
        %v689 = vrot.slane %v688, 1
        %v690 = vadd.f32 %v688, %v689
        %v691 = vadd.f32 %v621, %v690
        %692 = vst [vmem:[#allocation8 + $0x1] sm:$0x1] %v691
        %p693 = scmp.eq.s32.totalorder %s25, 1
        // Predicated region
        $region49: #{tpu_custom_call.1} parent=35 // pred_check
          %p694 = pneg %p693
        $region50: #{tpu_custom_call.1} parent=35 // pred_check_branch
          %696 = sbr.rel (%p694) target = $region52
        $region51: #{tpu_custom_call.1} parent=35 // pred_region
          %v697 = vld [vmem:[#allocation8] sm:$0x1]
          %v698 = vmul.f32 %v697, 0.001953125
          %v699 = vld [vmem:[#allocation8 + $0x1] sm:$0x1]
          %v700 = vmul.f32 %v699, 0.001953125
          %v701 = vmul.f32 %v698, %v698
          %v702 = vsub.f32 %v700, %v701
          %v703 = vmax.f32 %v702, 0.0
          %v704 = vld [vmem:[%s2] sm:$0x1]
          %v705 = vadd.f32 %v703, 0.0001
          %v706 = vrsqrt.pop %v705
          %v707 = vmul.f32 %v706, %v705
          %v708 = vmul.f32 %v707, %v706
          %v709 = vmul.f32 0.5, %v708
          %v710 = vsub.f32 1.5, %v709
          %v711 = vmul.f32 %v706, %v710
          %vm712 = vweird.f32 %v705
          %vm713 = vweird.f32 %v706
          %vm714 = vmor %vm712, %vm713
          %v715 = vsel %vm714, %v706, %v711
          %v716 = vmul.f32 %v704, %v715
          %v717 = vld [vmem:[%s3] sm:$0x1]
          %v718 = vmul.f32 %v698, %v716
          %v719 = vsub.f32 %v717, %v718
          %720 = vst [vmem:[#allocation8] sm:$0x1] %v716
          %721 = vst [vmem:[#allocation8 + $0x1] sm:$0x1] %v719
        $region52: #{tpu_custom_call.1} parent=35 // pred_fallthru
          _
        %s722 = sand.u32 %s122, 1
        %s723 = scalar_lea.sflag [#allocation4], %s722
        %s724 = sand.u32 %s122, 1
        %s725 = smul.addr %s724, 256
        %s726 = scalar_lea.vmem [#allocation7], %s725
        // Predicated region
        $region53: #{tpu_custom_call.1} parent=35 // pred_check
          %p727 = pneg %p132
        $region54: #{tpu_custom_call.1} parent=35 // pred_check_branch
          %729 = sbr.rel (%p727) target = $region56
        $region55: #{tpu_custom_call.1} parent=35 // pred_region
          %s730 = smul.u32 32, %s25
          %732 = vsyncadd %s723, 0
          %s733 = smul.addr %s730, 8
          %s734 = scalar_lea.hbm %s4, %s733
          %s735 = sshll.u32 %s726, 4
          %s736 = int_to_ptr.vmem [resolvable:$true] %s735
          %s737 = sshll.u32 %s734, 4
          %s738 = int_to_ptr.hbm [resolvable:$true] %s737
          %743 = dma.vmem_to_hbm [thread:$0]  %s736, 4096, %s738, %s723, 128, 128, 8
        $region56: #{tpu_custom_call.1} parent=35 // pred_fallthru
          _
        // Predicated region
        $region57: #{tpu_custom_call.1} parent=35 // pred_check
          %p744 = pneg %p153
        $region58: #{tpu_custom_call.1} parent=35 // pred_check_branch
          %746 = sbr.rel (%p744) target = $region60
        $region59: #{tpu_custom_call.1} parent=35 // pred_region
          %748 = vsyncadd [#allocation9], 0
          %s750 = sshll.u32 [#allocation8], 4
          %s751 = int_to_ptr.vmem [resolvable:$true] %s750
          %s752 = sshll.u32 %s5, 4
          %s753 = int_to_ptr.hbm [resolvable:$true] %s752
          %755 = dma.vmem_to_hbm [thread:$0]  %s751, 32, %s753, [#allocation9]
        $region60: #{tpu_custom_call.1} parent=35 // pred_fallthru
          _
        // Predicated region
        $region61: #{tpu_custom_call.1} parent=35 // pred_check
          %p756 = pneg %p153
        $region62: #{tpu_custom_call.1} parent=35 // pred_check_branch
          %758 = sbr.rel (%p756) target = $region64
        $region63: #{tpu_custom_call.1} parent=35 // pred_region
          %760 = dma.done [#allocation9], 32
        $region64: #{tpu_custom_call.1} parent=35 // pred_fallthru
          _
      $region36: #{tpu_custom_call.1} parent=5 // pred_fallthru
        _
      %p761 = scmp.le.s32.totalorder 2, %s20
      // Predicated region
      $region65: #{tpu_custom_call.1} parent=5 // pred_check
        %p762 = pneg %p761
      $region66: #{tpu_custom_call.1} parent=5 // pred_check_branch
        %764 = sbr.rel (%p762) target = $region68
      $region67: #{tpu_custom_call.1} parent=5 // pred_region
        %s765 = ssub.s32 %s20, 2
        // Predicated region
        $region69: #{tpu_custom_call.1} parent=67 // pred_check
          %p766 = pneg %p138
        $region70: #{tpu_custom_call.1} parent=67 // pred_check_branch
          %768 = sbr.rel (%p766) target = $region72
        $region71: #{tpu_custom_call.1} parent=67 // pred_region
          %s769 = sand.u32 %s123, 1
          %s770 = scalar_lea.sflag [#allocation4], %s769
          %s771 = sand.u32 %s123, 1
          %s772 = smul.addr %s771, 256
          %s773 = scalar_lea.vmem [#allocation7], %s772
          %775 = dma.done %s770, 4096
        $region72: #{tpu_custom_call.1} parent=67 // pred_fallthru
          _
      $region68: #{tpu_custom_call.1} parent=5 // pred_fallthru
        _
    $region6: #{tpu_custom_call.1} parent=1 // loop_footer
      %s24 = sadd.s32 1, %s20
    $region7: #{tpu_custom_call.1} parent=1 // loop_footer_branch
      %19 = sbr.rel target = $region3
    $region8: #{tpu_custom_call.1} parent=1 // loop_exit
      _
    %776 = vsyncpa [#allocation3], 1
    %s777 = scalar_lea.sflag [#allocation3], 1
    %778 = vsyncpa %s777, 1
    %779 = vsyncpa [#allocation6], 1
    %780 = vsyncpa [#allocation4], 1
    %s781 = scalar_lea.sflag [#allocation4], 1
    %782 = vsyncpa %s781, 1
    %783 = vsyncpa [#allocation9], 1

</llo_original>
